<compile_context>
chip_gen: v6e
topology: v6e:2x2x1
jax: 0.10.0
libtpu: 0.0.40
codegen_flags: <defaults>
</compile_context>

<pallas_src>
import numpy as np
import jax
import jax.numpy as jnp
from jax.experimental import pallas as pl
from jax.experimental.pallas import tpu as pltpu


# ----------------------------------------------------------------------------
# Wrapper: BN folding / layout plumbing + pallas_call (kernel defined inside
# as a closure over the static shape constants).
# ----------------------------------------------------------------------------
def st_gcn_forward(x, A, params, Kt):
    """st_gcn forward (eval mode).  x: (N, C_in, T, V), A: (T, V, V)."""
    N, C_in, T, V = x.shape
    C_out = params["W1"].shape[0]
    assert Kt % 2 == 1, "temporal kernel size must be odd (module asserts this)"
    pad = (Kt - 1) // 2
    TV = T * V
    eps = 1e-5

    # ---- fold BatchNorm (eval) into the adjacent convolutions ---------------
    def bn_fold(gamma, beta, mean, var):
        scale = gamma / jnp.sqrt(var + eps)
        return scale, beta - mean * scale

    s1, h1 = bn_fold(params["g1"], params["be1"], params["m1"], params["v1"])
    s2, h2 = bn_fold(params["g2"], params["be2"], params["m2"], params["v2"])
    sr, hr = bn_fold(params["gr"], params["ber"], params["mr"], params["vr"])

    W1f = (params["W1"] * s1[:, None]).astype(jnp.float32)      # BN1 scale commutes with (. @ A)
    b1f = (params["b1"] * s1).reshape(C_out, 1).astype(jnp.float32)
    h1c = h1.reshape(C_out, 1).astype(jnp.float32)              # BN1 shift, applied post-A

    W2f = params["W2"] * s2[:, None, None]                      # (C_out, C_out, Kt), BN2 folded
    W2t = jnp.transpose(W2f, (2, 0, 1)).astype(jnp.float32)     # (Kt, C_out, C_out)
    Wrf = (params["Wr"] * sr[:, None]).astype(jnp.float32)      # residual conv + BN fully folded
    badd = ((params["b2"] * s2 + h2)
            + (params["br"] * sr + hr)).reshape(C_out, 1).astype(jnp.float32)

    scalars = jnp.stack([params["a1"], params["aout"]]).astype(jnp.float32)  # PReLU slopes (SMEM)

    # ---- block-diagonal frame grouping for the graph conv -------------------
    # Group G frames so G*V ~ 128 lanes; Abd stays tiny (nG * (G*V)^2 elems).
    G = max(1, min(T, 128 // max(V, 1)))
    while T % G:
        G -= 1
    nG, GV = T // G, G * V
    A_r = A.astype(jnp.float32).reshape(nG, G, V, V)
    eyeG = jnp.eye(G, dtype=jnp.float32)
    Abd = (A_r[:, :, :, None, :] * eyeG[None, :, None, :, None]).reshape(nG, GV, GV)

    x_flat = x.astype(jnp.float32).reshape(N, C_in, TV)         # lane-dense (C_in, T*V)

    # ---- Pallas kernel (lane-dense (channels, T*V) layout throughout) -------
    def kernel(x_ref, abd_ref, w1_ref, b1_ref, h1_ref, w2_ref, wr_ref,
               badd_ref, scal_ref, o_ref):
        xb = x_ref[0]                                            # (C_in, TV)

        # gcn 1x1 conv (BN1 scale folded): one lane-dense 2-D matmul.
        y = jnp.dot(w1_ref[...], xb,
                    preferred_element_type=jnp.float32) + b1_ref[...]

        # graph conv: per-group block-diagonal matmul (GV ~ 128 lanes).
        if nG == 1:
            g = jnp.dot(y, abd_ref[0], preferred_element_type=jnp.float32)
        else:
            g = jnp.concatenate(
                [jnp.dot(y[:, gi * GV:(gi + 1) * GV], abd_ref[gi],
                         preferred_element_type=jnp.float32)
                 for gi in range(nG)], axis=1)

        # BN1 shift (scale already folded) + PReLU.
        z = g + h1_ref[...]
        a1 = scal_ref[0]
        z = jnp.where(z > 0, z, a1 * z)

        # temporal (Kt,1) conv, 'same' padding along T:
        # single zero-padded copy, each tap is a static slice (shift of kt*V
        # columns).  No per-tap concat+zeros, no weight broadcast.
        if pad > 0:
            strip = jnp.zeros((C_out, pad * V), jnp.float32)
            zp = jnp.concatenate([strip, z, strip], axis=1)      # (C_out, (T+2*pad)*V)
        else:
            zp = z

        # Accumulator starts with the residual branch (conv + BN folded) plus
        # the combined tcn/residual bias -> no separate long-lived residual.
        acc = jnp.dot(wr_ref[...], xb,
                      preferred_element_type=jnp.float32) + badd_ref[...]
        for kt in range(Kt):                                     # static tiny loop (Kt=3)
            zs = z if kt == pad else zp[:, kt * V: kt * V + TV]
            acc = acc + jnp.dot(w2_ref[kt], zs,
                                preferred_element_type=jnp.float32)

        # final PReLU + lane-dense store.
        aout = scal_ref[1]
        out = jnp.where(acc > 0, acc, aout * acc)
        o_ref[0] = out.astype(o_ref.dtype)

    flops = N * (2 * C_out * C_in * TV              # gcn 1x1 conv
                 + 2 * C_out * nG * GV * GV         # graph conv (block-diagonal)
                 + 2 * Kt * C_out * C_out * TV      # temporal conv
                 + 2 * C_out * C_in * TV)           # residual 1x1 conv
    bytes_accessed = 4 * (N * C_in * TV + N * C_out * TV + nG * GV * GV
                          + 2 * C_out * C_in + Kt * C_out * C_out
                          + 3 * C_out + 2)

    out_flat = pl.pallas_call(
        kernel,
        out_shape=jax.ShapeDtypeStruct((N, C_out, TV), jnp.float32),
        grid=(N,),
        in_specs=[
            pl.BlockSpec((1, C_in, TV), lambda n: (n, 0, 0)),       # x (lane-dense)
            pl.BlockSpec((nG, GV, GV), lambda n: (0, 0, 0)),        # block-diag A
            pl.BlockSpec((C_out, C_in), lambda n: (0, 0)),          # W1 (BN1-folded)
            pl.BlockSpec((C_out, 1), lambda n: (0, 0)),             # b1 (BN1-folded)
            pl.BlockSpec((C_out, 1), lambda n: (0, 0)),             # h1 shift
            pl.BlockSpec((Kt, C_out, C_out), lambda n: (0, 0, 0)),  # W2 taps (BN2-folded)
            pl.BlockSpec((C_out, C_in), lambda n: (0, 0)),          # Wr (BNr-folded)
            pl.BlockSpec((C_out, 1), lambda n: (0, 0)),             # b2f + brf
            pl.BlockSpec(memory_space=pltpu.MemorySpace.SMEM),      # [a1, aout]
        ],
        out_specs=pl.BlockSpec((1, C_out, TV), lambda n: (n, 0, 0)),
        compiler_params=pltpu.CompilerParams(
            dimension_semantics=("parallel",)),
        cost_estimate=pl.CostEstimate(flops=flops, transcendentals=0,
                                      bytes_accessed=bytes_accessed),
    )(x_flat, Abd, W1f, b1f, h1c, W2t, Wrf, badd, scalars)

    return out_flat.reshape(N, C_out, T, V), A


# ----------------------------------------------------------------------------
# Pure-JAX reference reproducing the PyTorch forward (eval mode) for checking.
# ----------------------------------------------------------------------------
def st_gcn_reference(x, A, p, Kt):
    eps = 1e-5
    N, C_in, T, V = x.shape

    def bn(v, gamma, beta, mean, var):
        return ((v - mean[None, :, None, None])
                / jnp.sqrt(var + eps)[None, :, None, None]
                * gamma[None, :, None, None] + beta[None, :, None, None])

    def prelu(v, a):
        return jnp.where(v > 0, v, a * v)

    # gcn
    y = jnp.einsum('oc,nctv->notv', p["W1"], x) + p["b1"][None, :, None, None]
    g = jnp.einsum('nctv,tvw->nctw', y, A)
    # tcn
    z = prelu(bn(g, p["g1"], p["be1"], p["m1"], p["v1"]), p["a1"])
    pad = (Kt - 1) // 2
    zp = jnp.pad(z, ((0, 0), (0, 0), (pad, pad), (0, 0)))
    tc = p["b2"][None, :, None, None]
    for kt in range(Kt):
        tc = tc + jnp.einsum('oc,nctv->notv', p["W2"][:, :, kt],
                             zp[:, :, kt:kt + T, :])
    tc = bn(tc, p["g2"], p["be2"], p["m2"], p["v2"])
    # residual (conv + bn path since C_in != C_out)
    r = jnp.einsum('oc,nctv->notv', p["Wr"], x) + p["br"][None, :, None, None]
    r = bn(r, p["gr"], p["ber"], p["mr"], p["vr"])
    out = prelu(tc + r, p["aout"])
    return out, A


# ----------------------------------------------------------------------------
if __name__ == "__main__":
    # Small shapes consistent with the module.  The grcln einsum
    # 'nctv,tvw->nctw' requires A.shape[0] == T, so kernel_size = (Kt, T).
    N, C_in, C_out, T, V = 2, 4, 8, 8, 16
    Kt = 3                                # temporal kernel (odd)

    key = jax.random.PRNGKey(0)
    ks = jax.random.split(key, 24)

    x = jax.random.normal(ks[0], (N, C_in, T, V), jnp.float32)
    A = jax.random.normal(ks[1], (T, V, V), jnp.float32) * 0.3

    params = {
        # gcn 1x1 conv
        "W1": jax.random.normal(ks[2], (C_out, C_in), jnp.float32) * 0.3,
        "b1": jax.random.normal(ks[3], (C_out,), jnp.float32) * 0.1,
        # tcn BN1
        "g1": 1.0 + 0.1 * jax.random.normal(ks[4], (C_out,), jnp.float32),
        "be1": 0.1 * jax.random.normal(ks[5], (C_out,), jnp.float32),
        "m1": 0.1 * jax.random.normal(ks[6], (C_out,), jnp.float32),
        "v1": jax.random.uniform(ks[7], (C_out,), jnp.float32, 0.5, 1.5),
        # tcn PReLU
        "a1": jnp.asarray(0.25, jnp.float32),
        # tcn temporal conv (Kt,1)
        "W2": jax.random.normal(ks[8], (C_out, C_out, Kt), jnp.float32) * 0.2,
        "b2": jax.random.normal(ks[9], (C_out,), jnp.float32) * 0.1,
        # tcn BN2
        "g2": 1.0 + 0.1 * jax.random.normal(ks[10], (C_out,), jnp.float32),
        "be2": 0.1 * jax.random.normal(ks[11], (C_out,), jnp.float32),
        "m2": 0.1 * jax.random.normal(ks[12], (C_out,), jnp.float32),
        "v2": jax.random.uniform(ks[13], (C_out,), jnp.float32, 0.5, 1.5),
        # residual 1x1 conv + BN
        "Wr": jax.random.normal(ks[14], (C_out, C_in), jnp.float32) * 0.3,
        "br": jax.random.normal(ks[15], (C_out,), jnp.float32) * 0.1,
        "gr": 1.0 + 0.1 * jax.random.normal(ks[16], (C_out,), jnp.float32),
        "ber": 0.1 * jax.random.normal(ks[17], (C_out,), jnp.float32),
        "mr": 0.1 * jax.random.normal(ks[18], (C_out,), jnp.float32),
        "vr": jax.random.uniform(ks[19], (C_out,), jnp.float32, 0.5, 1.5),
        # final PReLU
        "aout": jnp.asarray(0.1, jnp.float32),
    }

    out, A_out = st_gcn_forward(x, A, params, Kt)
    out = jax.block_until_ready(out)

    ref, _ = st_gcn_reference(x, A, params, Kt)
    ref = jax.block_until_ready(ref)

    assert out.shape == (N, C_out, T, V)
    np.testing.assert_allclose(np.asarray(out), np.asarray(ref),
                               rtol=1e-3, atol=1e-3)
    print("KERNEL_OK")
</pallas_src>

<mosaic_0001>
module attributes {stable_mosaic.version = 11 : i64} {
  func.func @kernel(%arg0: i32, %arg1: memref<1x4x128xf32, #tpu.memory_space<vmem>>, %arg2: memref<1x128x128xf32, #tpu.memory_space<vmem>>, %arg3: memref<8x4xf32, #tpu.memory_space<vmem>>, %arg4: memref<8x1xf32, #tpu.memory_space<vmem>>, %arg5: memref<8x1xf32, #tpu.memory_space<vmem>>, %arg6: memref<3x8x8xf32, #tpu.memory_space<vmem>>, %arg7: memref<8x4xf32, #tpu.memory_space<vmem>>, %arg8: memref<8x1xf32, #tpu.memory_space<vmem>>, %arg9: memref<2xf32, #tpu.memory_space<smem>>, %arg10: memref<1x8x128xf32, #tpu.memory_space<vmem>>) attributes {dimension_semantics = [#tpu.dimension_semantics<parallel>], iteration_bounds = array<i64: 2>, scalar_prefetch = 0 : i64, scratch_operands = 0 : i64, tpu.core_type = #tpu.core_type<tc>, window_params = [{transform_indices = @transform_0, window_bounds = array<i64: 1, 4, 128>}, {pipeline_mode = #tpu.pipeline_mode<synchronous>, transform_indices = @transform_1, window_bounds = array<i64: 1, 128, 128>}, {pipeline_mode = #tpu.pipeline_mode<synchronous>, transform_indices = @transform_2, window_bounds = array<i64: 8, 4>}, {pipeline_mode = #tpu.pipeline_mode<synchronous>, transform_indices = @transform_3, window_bounds = array<i64: 8, 1>}, {pipeline_mode = #tpu.pipeline_mode<synchronous>, transform_indices = @transform_4, window_bounds = array<i64: 8, 1>}, {pipeline_mode = #tpu.pipeline_mode<synchronous>, transform_indices = @transform_5, window_bounds = array<i64: 3, 8, 8>}, {pipeline_mode = #tpu.pipeline_mode<synchronous>, transform_indices = @transform_6, window_bounds = array<i64: 8, 4>}, {pipeline_mode = #tpu.pipeline_mode<synchronous>, transform_indices = @transform_7, window_bounds = array<i64: 8, 1>}, {transform_indices = @transform_8, window_bounds = array<i64: 2>}, {transform_indices = @transform_9, window_bounds = array<i64: 1, 8, 128>}]} {
    %c0 = arith.constant 0 : index
    %c0_0 = arith.constant 0 : index
    %c0_1 = arith.constant 0 : index
    %0 = vector.load %arg1[%c0, %c0_0, %c0_1] : memref<1x4x128xf32, #tpu.memory_space<vmem>>, vector<1x4x128xf32>
    %1 = vector.shape_cast %0 : vector<1x4x128xf32> to vector<4x128xf32>
    %c0_2 = arith.constant 0 : index
    %c0_3 = arith.constant 0 : index
    %2 = vector.load %arg3[%c0_2, %c0_3] : memref<8x4xf32, #tpu.memory_space<vmem>>, vector<8x4xf32>
    %cst = arith.constant dense<0.000000e+00> : vector<8x128xf32>
    %3 = tpu.matmul %2, %1, %cst {dimension_numbers = #tpu.dot_dimension_numbers<[1], [0], [0], [1], [0, 0, 1, 1], [], []>} : vector<8x4xf32>, vector<4x128xf32>, vector<8x128xf32> -> vector<8x128xf32>
    %c0_4 = arith.constant 0 : index
    %c0_5 = arith.constant 0 : index
    %4 = vector.load %arg4[%c0_4, %c0_5] : memref<8x1xf32, #tpu.memory_space<vmem>>, vector<8x1xf32>
    %5 = vector.broadcast %4 : vector<8x1xf32> to vector<8x128xf32>
    %6 = arith.addf %3, %5 : vector<8x128xf32>
    %c0_6 = arith.constant 0 : index
    %c0_7 = arith.constant 0 : index
    %c0_8 = arith.constant 0 : index
    %7 = vector.load %arg2[%c0_6, %c0_7, %c0_8] : memref<1x128x128xf32, #tpu.memory_space<vmem>>, vector<1x128x128xf32>
    %8 = vector.shape_cast %7 : vector<1x128x128xf32> to vector<128x128xf32>
    %cst_9 = arith.constant dense<0.000000e+00> : vector<8x128xf32>
    %9 = tpu.matmul %6, %8, %cst_9 {dimension_numbers = #tpu.dot_dimension_numbers<[1], [0], [0], [1], [0, 0, 1, 1], [], []>} : vector<8x128xf32>, vector<128x128xf32>, vector<8x128xf32> -> vector<8x128xf32>
    %c0_10 = arith.constant 0 : index
    %c0_11 = arith.constant 0 : index
    %10 = vector.load %arg5[%c0_10, %c0_11] : memref<8x1xf32, #tpu.memory_space<vmem>>, vector<8x1xf32>
    %11 = vector.broadcast %10 : vector<8x1xf32> to vector<8x128xf32>
    %12 = arith.addf %9, %11 : vector<8x128xf32>
    %c0_12 = arith.constant 0 : index
    %13 = memref.load %arg9[%c0_12] : memref<2xf32, #tpu.memory_space<smem>>
    %cst_13 = arith.constant 0.000000e+00 : f32
    %14 = vector.broadcast %cst_13 : f32 to vector<8x128xf32>
    %15 = arith.cmpf ogt, %12, %14 : vector<8x128xf32>
    %16 = vector.broadcast %13 : f32 to vector<8x128xf32>
    %17 = arith.mulf %16, %12 : vector<8x128xf32>
    %18 = arith.select %15, %12, %17 : vector<8x128xi1>, vector<8x128xf32>
    %cst_14 = arith.constant 0.000000e+00 : f32
    %19 = vector.broadcast %cst_14 : f32 to vector<8x16xf32>
    %20 = tpu.concatenate %19, %18, %19 in 1 : vector<8x16xf32>, vector<8x128xf32>, vector<8x16xf32> -> vector<8x160xf32>
    %c0_15 = arith.constant 0 : index
    %c0_16 = arith.constant 0 : index
    %21 = vector.load %arg7[%c0_15, %c0_16] : memref<8x4xf32, #tpu.memory_space<vmem>>, vector<8x4xf32>
    %cst_17 = arith.constant dense<0.000000e+00> : vector<8x128xf32>
    %22 = tpu.matmul %21, %1, %cst_17 {dimension_numbers = #tpu.dot_dimension_numbers<[1], [0], [0], [1], [0, 0, 1, 1], [], []>} : vector<8x4xf32>, vector<4x128xf32>, vector<8x128xf32> -> vector<8x128xf32>
    %c0_18 = arith.constant 0 : index
    %c0_19 = arith.constant 0 : index
    %23 = vector.load %arg8[%c0_18, %c0_19] : memref<8x1xf32, #tpu.memory_space<vmem>>, vector<8x1xf32>
    %24 = vector.broadcast %23 : vector<8x1xf32> to vector<8x128xf32>
    %25 = arith.addf %22, %24 : vector<8x128xf32>
    %26 = vector.extract_strided_slice %20 {offsets = [0, 0], sizes = [8, 128], strides = [1, 1]} : vector<8x160xf32> to vector<8x128xf32>
    %c0_20 = arith.constant 0 : index
    %c0_21 = arith.constant 0 : index
    %c0_22 = arith.constant 0 : index
    %27 = vector.load %arg6[%c0_20, %c0_21, %c0_22] : memref<3x8x8xf32, #tpu.memory_space<vmem>>, vector<1x8x8xf32>
    %28 = vector.shape_cast %27 : vector<1x8x8xf32> to vector<8x8xf32>
    %cst_23 = arith.constant dense<0.000000e+00> : vector<8x128xf32>
    %29 = tpu.matmul %28, %26, %cst_23 {dimension_numbers = #tpu.dot_dimension_numbers<[1], [0], [0], [1], [0, 0, 1, 1], [], []>} : vector<8x8xf32>, vector<8x128xf32>, vector<8x128xf32> -> vector<8x128xf32>
    %30 = arith.addf %25, %29 : vector<8x128xf32>
    %c1 = arith.constant 1 : index
    %c0_24 = arith.constant 0 : index
    %c0_25 = arith.constant 0 : index
    %31 = vector.load %arg6[%c1, %c0_24, %c0_25] : memref<3x8x8xf32, #tpu.memory_space<vmem>>, vector<1x8x8xf32>
    %32 = vector.shape_cast %31 : vector<1x8x8xf32> to vector<8x8xf32>
    %cst_26 = arith.constant dense<0.000000e+00> : vector<8x128xf32>
    %33 = tpu.matmul %32, %18, %cst_26 {dimension_numbers = #tpu.dot_dimension_numbers<[1], [0], [0], [1], [0, 0, 1, 1], [], []>} : vector<8x8xf32>, vector<8x128xf32>, vector<8x128xf32> -> vector<8x128xf32>
    %34 = arith.addf %30, %33 : vector<8x128xf32>
    %35 = vector.extract_strided_slice %20 {offsets = [0, 32], sizes = [8, 128], strides = [1, 1]} : vector<8x160xf32> to vector<8x128xf32>
    %c2 = arith.constant 2 : index
    %c0_27 = arith.constant 0 : index
    %c0_28 = arith.constant 0 : index
    %36 = vector.load %arg6[%c2, %c0_27, %c0_28] : memref<3x8x8xf32, #tpu.memory_space<vmem>>, vector<1x8x8xf32>
    %37 = vector.shape_cast %36 : vector<1x8x8xf32> to vector<8x8xf32>
    %cst_29 = arith.constant dense<0.000000e+00> : vector<8x128xf32>
    %38 = tpu.matmul %37, %35, %cst_29 {dimension_numbers = #tpu.dot_dimension_numbers<[1], [0], [0], [1], [0, 0, 1, 1], [], []>} : vector<8x8xf32>, vector<8x128xf32>, vector<8x128xf32> -> vector<8x128xf32>
    %39 = arith.addf %34, %38 : vector<8x128xf32>
    %c1_30 = arith.constant 1 : index
    %40 = memref.load %arg9[%c1_30] : memref<2xf32, #tpu.memory_space<smem>>
    %cst_31 = arith.constant 0.000000e+00 : f32
    %41 = vector.broadcast %cst_31 : f32 to vector<8x128xf32>
    %42 = arith.cmpf ogt, %39, %41 : vector<8x128xf32>
    %43 = vector.broadcast %40 : f32 to vector<8x128xf32>
    %44 = arith.mulf %43, %39 : vector<8x128xf32>
    %45 = arith.select %42, %39, %44 : vector<8x128xi1>, vector<8x128xf32>
    %c0_32 = arith.constant 0 : index
    %c0_33 = arith.constant 0 : index
    %c0_34 = arith.constant 0 : index
    %46 = vector.load %arg10[%c0_32, %c0_33, %c0_34] : memref<1x8x128xf32, #tpu.memory_space<vmem>>, vector<1x8x128xf32>
    %47 = vector.shape_cast %46 : vector<1x8x128xf32> to vector<8x128xf32>
    %48 = vector.shape_cast %45 : vector<8x128xf32> to vector<1x8x128xf32>
    tpu.vector_store %arg10[%c0_32, %c0_33, %c0_34], %48 {strides = array<i32>} : memref<1x8x128xf32, #tpu.memory_space<vmem>>, vector<1x8x128xf32>,
    return
  }
  func.func @transform_0(%arg0: i32) -> (i32, i32, i32) {
    %c0_i32 = arith.constant 0 : i32
    %c0_i32_0 = arith.constant 0 : i32
    %c0_i32_1 = arith.constant 0 : i32
    return %arg0, %c0_i32, %c0_i32_0 : i32, i32, i32
  }
  func.func @transform_1(%arg0: i32) -> (i32, i32, i32) {
    %c0_i32 = arith.constant 0 : i32
    %c0_i32_0 = arith.constant 0 : i32
    %c0_i32_1 = arith.constant 0 : i32
    %c0_i32_2 = arith.constant 0 : i32
    return %c0_i32, %c0_i32_0, %c0_i32_1 : i32, i32, i32
  }
  func.func @transform_2(%arg0: i32) -> (i32, i32) {
    %c0_i32 = arith.constant 0 : i32
    %c0_i32_0 = arith.constant 0 : i32
    %c0_i32_1 = arith.constant 0 : i32
    return %c0_i32, %c0_i32_0 : i32, i32
  }
  func.func @transform_3(%arg0: i32) -> (i32, i32) {
    %c0_i32 = arith.constant 0 : i32
    %c0_i32_0 = arith.constant 0 : i32
    %c0_i32_1 = arith.constant 0 : i32
    return %c0_i32, %c0_i32_0 : i32, i32
  }
  func.func @transform_4(%arg0: i32) -> (i32, i32) {
    %c0_i32 = arith.constant 0 : i32
    %c0_i32_0 = arith.constant 0 : i32
    %c0_i32_1 = arith.constant 0 : i32
    return %c0_i32, %c0_i32_0 : i32, i32
  }
  func.func @transform_5(%arg0: i32) -> (i32, i32, i32) {
    %c0_i32 = arith.constant 0 : i32
    %c0_i32_0 = arith.constant 0 : i32
    %c0_i32_1 = arith.constant 0 : i32
    %c0_i32_2 = arith.constant 0 : i32
    return %c0_i32, %c0_i32_0, %c0_i32_1 : i32, i32, i32
  }
  func.func @transform_6(%arg0: i32) -> (i32, i32) {
    %c0_i32 = arith.constant 0 : i32
    %c0_i32_0 = arith.constant 0 : i32
    %c0_i32_1 = arith.constant 0 : i32
    return %c0_i32, %c0_i32_0 : i32, i32
  }
  func.func @transform_7(%arg0: i32) -> (i32, i32) {
    %c0_i32 = arith.constant 0 : i32
    %c0_i32_0 = arith.constant 0 : i32
    %c0_i32_1 = arith.constant 0 : i32
    return %c0_i32, %c0_i32_0 : i32, i32
  }
  func.func @transform_8(%arg0: i32) -> i32 {
    %c0_i32 = arith.constant 0 : i32
    %c0_i32_0 = arith.constant 0 : i32
    return %c0_i32 : i32
  }
  func.func @transform_9(%arg0: i32) -> (i32, i32, i32) {
    %c0_i32 = arith.constant 0 : i32
    %c0_i32_0 = arith.constant 0 : i32
    %c0_i32_1 = arith.constant 0 : i32
    return %arg0, %c0_i32, %c0_i32_0 : i32, i32, i32
  }
}

</mosaic_0001>

<llo_original>
// kernel: tpu_custom_call.1
$region0: #{tpu_custom_call.1}
  #allocation0 [shape = 'u32[]', space=smem, size = 0x4, offset = 0x4, fixed_abs, tag = 'smem constant byte address 0x4 - core index']
  #allocation1 [shape = 'u32[144,128]{1,0:T(1,128)}', space=vmem, size = 0x12000, scoped, tag = 'internal scratch']
  %s0 = inlined_call_operand.vmem [shape: f32[2,4,128], index: 0, kind: input, shape index: {}]
  %s1 = inlined_call_operand.hbm [shape: f32[1,128,128], index: 1, kind: input, shape index: {}]
  %s2 = inlined_call_operand.vmem [shape: f32[8,4], index: 2, kind: input, shape index: {}]
  %s3 = inlined_call_operand.vmem [shape: f32[8,1], index: 3, kind: input, shape index: {}]
  %s4 = inlined_call_operand.vmem [shape: f32[8,1], index: 4, kind: input, shape index: {}]
  %s5 = inlined_call_operand.vmem [shape: f32[3,8,8], index: 5, kind: input, shape index: {}]
  %s6 = inlined_call_operand.vmem [shape: f32[8,4], index: 6, kind: input, shape index: {}]
  %s7 = inlined_call_operand.vmem [shape: f32[8,1], index: 7, kind: input, shape index: {}]
  %s8 = inlined_call_operand.vmem [shape: f32[2], index: 8, kind: input, shape index: {}]
  %s9 = inlined_call_operand.hbm [shape: f32[2,8,128], index: 9, kind: output, shape index: {}]
  %s10 = sld [smem:[#allocation0]]
  $region77: #{tpu_custom_call.1} parent=0
    _
  %s12 = ssub.s32 1, %s10
  %s13 = scalar_select 0, %s12, %s10
  $region1: #{tpu_custom_call.1} parent=0
    #allocation2 [shape = 'u8[65536]{0}', space=vmem, size = 0x10000, scoped, tag = 'input window, operand 1, single buffered']
    #allocation3 [shape = 's32[2]{0}', space=sflag, size = 0x8, scoped, tag = 'scoped memory for tpu_custom_call.1']
    #allocation4 [shape = 's32[2]{0}', space=sflag, size = 0x8, scoped, tag = 'scoped memory for tpu_custom_call.1']
    #allocation5 [shape = 's32[2]{0}', space=sflag, size = 0x8, scoped, tag = 'scoped memory for tpu_custom_call.1']
    #allocation6 [shape = 'u8[512]{0}', space=smem, size = 0x200, scoped, tag = 'input window, operand 8, single buffered']
    #allocation7 [shape = 'u8[8192]{0}', space=vmem, size = 0x2000, scoped, tag = 'output window, operand 0']
    %14 = vsyncpa [#allocation3], 0
    %15 = vsyncpa [#allocation5], 0
    %16 = vsyncpa [#allocation4], 0
    %s17 = scalar_lea.sflag [#allocation4], 1
    %18 = vsyncpa %s17, 0
    loop: start=0, step=1, limit=4
    $region2: #{tpu_custom_call.1} parent=1 // loop_pre_header
      _
    $region3: #{tpu_custom_call.1} parent=1 // loop_header
      %s20 = sphi 0, %s24
      %p21 = scmp.ge.s32.totalorder %s20, 4
      %s30 = sphi 0, %s32
      %s33 = sphi 0, %s30
      %s34 = sphi 0, %s33
      %s50 = sphi 0, %s34
      %s54 = sphi 0, %s54
      %s56 = sphi 0, %s54
      %s57 = sphi 0, %s56
      %s71 = sphi 0, %s57
      %s75 = sphi 0, %s75
      %s77 = sphi 0, %s75
      %s78 = sphi 0, %s77
      %s92 = sphi 0, %s78
      %s96 = sphi 0, %s96
      %s98 = sphi 0, %s96
      %s99 = sphi 0, %s98
      %s113 = sphi 0, %s99
      %s117 = sphi 0, %s117
      %s119 = sphi 0, %s117
      %s120 = sphi 0, %s119
      %s134 = sphi 0, %s120
      %s138 = sphi 0, %s138
      %s140 = sphi 0, %s138
      %s141 = sphi 0, %s140
      %s155 = sphi 0, %s141
      %s159 = sphi 0, %s159
      %s161 = sphi 0, %s159
      %s162 = sphi 0, %s161
      %s176 = sphi 0, %s162
      %s180 = sphi 0, %s180
      %s182 = sphi 0, %s180
      %s183 = sphi 0, %s182
      %s197 = sphi 0, %s183
      %s201 = sphi 0, %s201
      %s203 = sphi 0, %s201
      %s204 = sphi 0, %s203
      %s218 = sphi 0, %s204
      %s224 = sphi 0, %s226
      %s227 = sphi 0, %s224
      %s228 = sphi 0, %s227
      %s244 = sphi 0, %s228
    $region4: #{tpu_custom_call.1} parent=1 // loop_header_branch
      %23 = sbr.rel (%p21) target = $region8
    $region5: #{tpu_custom_call.1} parent=1 // loop_body
      %s25 = ssub.s32 %s20, 1
      %s26 = ssub.s32 %s20, 2
      %s27 = sadd.s32 %s20, 1
      %s28 = ssub.s32 %s20, %s27
      %p29 = scmp.eq.s32.totalorder %s28, 0
      %s31 = sadd.s32 %s30, 1
      %s32 = scalar_select %p29, %s30, %s31
      %p35 = pneg %p29
      %p36 = scmp.eq.s32.totalorder %s20, 1
      %p37 = por %p35, %p36
      %p38 = scmp.ne.s32.totalorder %s30, %s33
      %p39 = scmp.eq.s32.totalorder %s20, 0
      %p40 = por %p38, %p39
      %p41 = scmp.ne.s32.totalorder %s30, %s33
      %p42 = scmp.eq.s32.totalorder %s25, 1
      %p43 = por %p41, %p42
      %p44 = scmp.ne.s32.totalorder %s33, %s34
      %p45 = scmp.eq.s32.totalorder %s25, 0
      %p46 = por %p44, %p45
      %p47 = scmp.ne.s32.totalorder %s33, %s34
      %p48 = scmp.eq.s32.totalorder %s26, 1
      %p49 = por %p47, %p48
      %p51 = scmp.ne.s32.totalorder %s34, %s50
      %p52 = scmp.eq.s32.totalorder %s26, 0
      %p53 = por %p51, %p52
      %s55 = sadd.s32 %s54, 1
      %p58 = scmp.eq.s32.totalorder %s20, 1
      %p59 = scmp.ne.s32.totalorder %s54, %s56
      %p60 = scmp.eq.s32.totalorder %s20, 0
      %p61 = por %p59, %p60
      %p62 = scmp.ne.s32.totalorder %s54, %s56
      %p63 = scmp.eq.s32.totalorder %s25, 1
      %p64 = por %p62, %p63
      %p65 = scmp.ne.s32.totalorder %s56, %s57
      %p66 = scmp.eq.s32.totalorder %s25, 0
      %p67 = por %p65, %p66
      %p68 = scmp.ne.s32.totalorder %s56, %s57
      %p69 = scmp.eq.s32.totalorder %s26, 1
      %p70 = por %p68, %p69
      %p72 = scmp.ne.s32.totalorder %s57, %s71
      %p73 = scmp.eq.s32.totalorder %s26, 0
      %p74 = por %p72, %p73
      %s76 = sadd.s32 %s75, 1
      %p79 = scmp.eq.s32.totalorder %s20, 1
      %p80 = scmp.ne.s32.totalorder %s75, %s77
      %p81 = scmp.eq.s32.totalorder %s20, 0
      %p82 = por %p80, %p81
      %p83 = scmp.ne.s32.totalorder %s75, %s77
      %p84 = scmp.eq.s32.totalorder %s25, 1
      %p85 = por %p83, %p84
      %p86 = scmp.ne.s32.totalorder %s77, %s78
      %p87 = scmp.eq.s32.totalorder %s25, 0
      %p88 = por %p86, %p87
      %p89 = scmp.ne.s32.totalorder %s77, %s78
      %p90 = scmp.eq.s32.totalorder %s26, 1
      %p91 = por %p89, %p90
      %p93 = scmp.ne.s32.totalorder %s78, %s92
      %p94 = scmp.eq.s32.totalorder %s26, 0
      %p95 = por %p93, %p94
      %s97 = sadd.s32 %s96, 1
      %p100 = scmp.eq.s32.totalorder %s20, 1
      %p101 = scmp.ne.s32.totalorder %s96, %s98
      %p102 = scmp.eq.s32.totalorder %s20, 0
      %p103 = por %p101, %p102
      %p104 = scmp.ne.s32.totalorder %s96, %s98
      %p105 = scmp.eq.s32.totalorder %s25, 1
      %p106 = por %p104, %p105
      %p107 = scmp.ne.s32.totalorder %s98, %s99
      %p108 = scmp.eq.s32.totalorder %s25, 0
      %p109 = por %p107, %p108
      %p110 = scmp.ne.s32.totalorder %s98, %s99
      %p111 = scmp.eq.s32.totalorder %s26, 1
      %p112 = por %p110, %p111
      %p114 = scmp.ne.s32.totalorder %s99, %s113
      %p115 = scmp.eq.s32.totalorder %s26, 0
      %p116 = por %p114, %p115
      %s118 = sadd.s32 %s117, 1
      %p121 = scmp.eq.s32.totalorder %s20, 1
      %p122 = scmp.ne.s32.totalorder %s117, %s119
      %p123 = scmp.eq.s32.totalorder %s20, 0
      %p124 = por %p122, %p123
      %p125 = scmp.ne.s32.totalorder %s117, %s119
      %p126 = scmp.eq.s32.totalorder %s25, 1
      %p127 = por %p125, %p126
      %p128 = scmp.ne.s32.totalorder %s119, %s120
      %p129 = scmp.eq.s32.totalorder %s25, 0
      %p130 = por %p128, %p129
      %p131 = scmp.ne.s32.totalorder %s119, %s120
      %p132 = scmp.eq.s32.totalorder %s26, 1
      %p133 = por %p131, %p132
      %p135 = scmp.ne.s32.totalorder %s120, %s134
      %p136 = scmp.eq.s32.totalorder %s26, 0
      %p137 = por %p135, %p136
      %s139 = sadd.s32 %s138, 1
      %p142 = scmp.eq.s32.totalorder %s20, 1
      %p143 = scmp.ne.s32.totalorder %s138, %s140
      %p144 = scmp.eq.s32.totalorder %s20, 0
      %p145 = por %p143, %p144
      %p146 = scmp.ne.s32.totalorder %s138, %s140
      %p147 = scmp.eq.s32.totalorder %s25, 1
      %p148 = por %p146, %p147
      %p149 = scmp.ne.s32.totalorder %s140, %s141
      %p150 = scmp.eq.s32.totalorder %s25, 0
      %p151 = por %p149, %p150
      %p152 = scmp.ne.s32.totalorder %s140, %s141
      %p153 = scmp.eq.s32.totalorder %s26, 1
      %p154 = por %p152, %p153
      %p156 = scmp.ne.s32.totalorder %s141, %s155
      %p157 = scmp.eq.s32.totalorder %s26, 0
      %p158 = por %p156, %p157
      %s160 = sadd.s32 %s159, 1
      %p163 = scmp.eq.s32.totalorder %s20, 1
      %p164 = scmp.ne.s32.totalorder %s159, %s161
      %p165 = scmp.eq.s32.totalorder %s20, 0
      %p166 = por %p164, %p165
      %p167 = scmp.ne.s32.totalorder %s159, %s161
      %p168 = scmp.eq.s32.totalorder %s25, 1
      %p169 = por %p167, %p168
      %p170 = scmp.ne.s32.totalorder %s161, %s162
      %p171 = scmp.eq.s32.totalorder %s25, 0
      %p172 = por %p170, %p171
      %p173 = scmp.ne.s32.totalorder %s161, %s162
      %p174 = scmp.eq.s32.totalorder %s26, 1
      %p175 = por %p173, %p174
      %p177 = scmp.ne.s32.totalorder %s162, %s176
      %p178 = scmp.eq.s32.totalorder %s26, 0
      %p179 = por %p177, %p178
      %s181 = sadd.s32 %s180, 1
      %p184 = scmp.eq.s32.totalorder %s20, 1
      %p185 = scmp.ne.s32.totalorder %s180, %s182
      %p186 = scmp.eq.s32.totalorder %s20, 0
      %p187 = por %p185, %p186
      %p188 = scmp.ne.s32.totalorder %s180, %s182
      %p189 = scmp.eq.s32.totalorder %s25, 1
      %p190 = por %p188, %p189
      %p191 = scmp.ne.s32.totalorder %s182, %s183
      %p192 = scmp.eq.s32.totalorder %s25, 0
      %p193 = por %p191, %p192
      %p194 = scmp.ne.s32.totalorder %s182, %s183
      %p195 = scmp.eq.s32.totalorder %s26, 1
      %p196 = por %p194, %p195
      %p198 = scmp.ne.s32.totalorder %s183, %s197
      %p199 = scmp.eq.s32.totalorder %s26, 0
      %p200 = por %p198, %p199
      %s202 = sadd.s32 %s201, 1
      %p205 = scmp.eq.s32.totalorder %s20, 1
      %p206 = scmp.ne.s32.totalorder %s201, %s203
      %p207 = scmp.eq.s32.totalorder %s20, 0
      %p208 = por %p206, %p207
      %p209 = scmp.ne.s32.totalorder %s201, %s203
      %p210 = scmp.eq.s32.totalorder %s25, 1
      %p211 = por %p209, %p210
      %p212 = scmp.ne.s32.totalorder %s203, %s204
      %p213 = scmp.eq.s32.totalorder %s25, 0
      %p214 = por %p212, %p213
      %p215 = scmp.ne.s32.totalorder %s203, %s204
      %p216 = scmp.eq.s32.totalorder %s26, 1
      %p217 = por %p215, %p216
      %p219 = scmp.ne.s32.totalorder %s204, %s218
      %p220 = scmp.eq.s32.totalorder %s26, 0
      %p221 = por %p219, %p220
      %s222 = ssub.s32 %s20, %s27
      %p223 = scmp.eq.s32.totalorder %s222, 0
      %s225 = sadd.s32 %s224, 1
      %s226 = scalar_select %p223, %s224, %s225
      %p229 = pneg %p223
      %p230 = scmp.eq.s32.totalorder %s20, 1
      %p231 = por %p229, %p230
      %p232 = scmp.ne.s32.totalorder %s224, %s227
      %p233 = scmp.eq.s32.totalorder %s20, 0
      %p234 = por %p232, %p233
      %p235 = scmp.ne.s32.totalorder %s224, %s227
      %p236 = scmp.eq.s32.totalorder %s25, 1
      %p237 = por %p235, %p236
      %p238 = scmp.ne.s32.totalorder %s227, %s228
      %p239 = scmp.eq.s32.totalorder %s25, 0
      %p240 = por %p238, %p239
      %p241 = scmp.ne.s32.totalorder %s227, %s228
      %p242 = scmp.eq.s32.totalorder %s26, 1
      %p243 = por %p241, %p242
      %p245 = scmp.ne.s32.totalorder %s228, %s244
      %p246 = scmp.eq.s32.totalorder %s26, 0
      %p247 = por %p245, %p246
      %p248 = scmp.le.s32.totalorder 1, %s20
      %p249 = scmp.lt.s32.totalorder %s20, 3
      %p250 = pnand %p248, %p249
      %p251 = pneg %p250
      // Predicated region
      $region9: #{tpu_custom_call.1} parent=5 // pred_check
        _
      $region10: #{tpu_custom_call.1} parent=5 // pred_check_branch
        %253 = sbr.rel (%p250) target = $region12
      $region11: #{tpu_custom_call.1} parent=5 // pred_region
        %s254 = ssub.s32 %s20, 1
        // Predicated region
        $region13: #{tpu_custom_call.1} parent=11 // pred_check
          %p255 = pneg %p67
        $region14: #{tpu_custom_call.1} parent=11 // pred_check_branch
          %257 = sbr.rel (%p255) target = $region16
        $region15: #{tpu_custom_call.1} parent=11 // pred_region
          %s259 = ssub.s32 2048, 2048
          %260 = vsyncadd [#allocation3], %s259
          %s261 = sshll.u32 [#allocation2], 4
          %s262 = int_to_ptr.vmem [resolvable:$true] %s261
          %267 = dma.hbm_to_vmem [thread:$0]  %s1, 2048, %s262, [#allocation3], 128, 128, 8
        $region16: #{tpu_custom_call.1} parent=11 // pred_fallthru
          _
        // Predicated region
        $region17: #{tpu_custom_call.1} parent=11 // pred_check
          %p268 = pneg %p88
        $region18: #{tpu_custom_call.1} parent=11 // pred_check_branch
          %270 = sbr.rel (%p268) target = $region20
        $region19: #{tpu_custom_call.1} parent=11 // pred_region
          _
        $region20: #{tpu_custom_call.1} parent=11 // pred_fallthru
          _
        // Predicated region
        $region21: #{tpu_custom_call.1} parent=11 // pred_check
          %p271 = pneg %p109
        $region22: #{tpu_custom_call.1} parent=11 // pred_check_branch
          %273 = sbr.rel (%p271) target = $region24
        $region23: #{tpu_custom_call.1} parent=11 // pred_region
          _
        $region24: #{tpu_custom_call.1} parent=11 // pred_fallthru
          _
        // Predicated region
        $region25: #{tpu_custom_call.1} parent=11 // pred_check
          %p274 = pneg %p130
        $region26: #{tpu_custom_call.1} parent=11 // pred_check_branch
          %276 = sbr.rel (%p274) target = $region28
        $region27: #{tpu_custom_call.1} parent=11 // pred_region
          _
        $region28: #{tpu_custom_call.1} parent=11 // pred_fallthru
          _
        // Predicated region
        $region29: #{tpu_custom_call.1} parent=11 // pred_check
          %p277 = pneg %p151
        $region30: #{tpu_custom_call.1} parent=11 // pred_check_branch
          %279 = sbr.rel (%p277) target = $region32
        $region31: #{tpu_custom_call.1} parent=11 // pred_region
          _
        $region32: #{tpu_custom_call.1} parent=11 // pred_fallthru
          _
        // Predicated region
        $region33: #{tpu_custom_call.1} parent=11 // pred_check
          %p280 = pneg %p172
        $region34: #{tpu_custom_call.1} parent=11 // pred_check_branch
          %282 = sbr.rel (%p280) target = $region36
        $region35: #{tpu_custom_call.1} parent=11 // pred_region
          _
        $region36: #{tpu_custom_call.1} parent=11 // pred_fallthru
          _
        // Predicated region
        $region37: #{tpu_custom_call.1} parent=11 // pred_check
          %p283 = pneg %p193
        $region38: #{tpu_custom_call.1} parent=11 // pred_check_branch
          %285 = sbr.rel (%p283) target = $region40
        $region39: #{tpu_custom_call.1} parent=11 // pred_region
          _
        $region40: #{tpu_custom_call.1} parent=11 // pred_fallthru
          _
        // Predicated region
        $region41: #{tpu_custom_call.1} parent=11 // pred_check
          %p286 = pneg %p214
        $region42: #{tpu_custom_call.1} parent=11 // pred_check_branch
          %288 = sbr.rel (%p286) target = $region44
        $region43: #{tpu_custom_call.1} parent=11 // pred_region
          %s290 = ssub.s32 16, 16
          %291 = vsyncadd [#allocation5], %s290
          %s293 = sshll.u32 %s8, 4
          %s294 = int_to_ptr.vmem [resolvable:$true] %s293
          %296 = dma.vmem_to_smem %s294, 16, [#allocation6], [#allocation5]
        $region44: #{tpu_custom_call.1} parent=11 // pred_fallthru
          _
      $region12: #{tpu_custom_call.1} parent=5 // pred_fallthru
        _
      %p297 = scmp.lt.s32.totalorder %s20, 2
      // Predicated region
      $region45: #{tpu_custom_call.1} parent=5 // pred_check
        %p298 = pneg %p297
      $region46: #{tpu_custom_call.1} parent=5 // pred_check_branch
        %300 = sbr.rel (%p298) target = $region48
      $region47: #{tpu_custom_call.1} parent=5 // pred_region
        // Predicated region
        $region49: #{tpu_custom_call.1} parent=47 // pred_check
          %p301 = pneg %p40
        $region50: #{tpu_custom_call.1} parent=47 // pred_check_branch
          %303 = sbr.rel (%p301) target = $region52
        $region51: #{tpu_custom_call.1} parent=47 // pred_region
          %p304 = scmp.lt.s32.totalorder %s20, 1
          %s305 = scalar_select %p304, %s20, 1
          %s306 = smul.addr %s305, 4
          %s307 = scalar_lea.vmem %s0, %s306
        $region52: #{tpu_custom_call.1} parent=47 // pred_fallthru
          _
      $region48: #{tpu_custom_call.1} parent=5 // pred_fallthru
        _
      %p308 = scmp.le.s32.totalorder 1, %s20
      %p309 = scmp.lt.s32.totalorder %s20, 3
      %p310 = pnand %p308, %p309
      %p311 = pneg %p310
      // Predicated region
      $region53: #{tpu_custom_call.1} parent=5 // pred_check
        _
      $region54: #{tpu_custom_call.1} parent=5 // pred_check_branch
        %313 = sbr.rel (%p310) target = $region56
      $region55: #{tpu_custom_call.1} parent=5 // pred_region
        %s314 = ssub.s32 %s20, 1
        // Predicated region
        $region57: #{tpu_custom_call.1} parent=55 // pred_check
          %p315 = pneg %p67
        $region58: #{tpu_custom_call.1} parent=55 // pred_check_branch
          %317 = sbr.rel (%p315) target = $region60
        $region59: #{tpu_custom_call.1} parent=55 // pred_region
          %318 = dma.done [#allocation3], 2048
        $region60: #{tpu_custom_call.1} parent=55 // pred_fallthru
          _
        // Predicated region
        $region61: #{tpu_custom_call.1} parent=55 // pred_check
          %p319 = pneg %p214
        $region62: #{tpu_custom_call.1} parent=55 // pred_check_branch
          %321 = sbr.rel (%p319) target = $region64
        $region63: #{tpu_custom_call.1} parent=55 // pred_region
          %322 = dma.done [#allocation5], 16
        $region64: #{tpu_custom_call.1} parent=55 // pred_fallthru
          _
        %323 = sfence
        %p324 = scmp.lt.s32.totalorder %s25, 1
        %s325 = scalar_select %p324, %s25, 1
        %s326 = smul.addr %s325, 4
        %s327 = scalar_lea.vmem %s0, %s326
        %p328 = pneg %p46
        %p329 = pneg %p43
        %p330 = pneg %p67
        %p331 = pneg %p64
        %p332 = pneg %p88
        %p333 = pneg %p85
        %p334 = pneg %p109
        %p335 = pneg %p106
        %p336 = pneg %p130
        %p337 = pneg %p127
        %p338 = pneg %p151
        %p339 = pneg %p148
        %p340 = pneg %p172
        %p341 = pneg %p169
        %p342 = pneg %p193
        %p343 = pneg %p190
        %p344 = pneg %p214
        %p345 = pneg %p211
        %p346 = pneg %p240
        %p347 = pneg %p237
        %s348 = sand.u32 %s227, 1
        %s349 = scalar_lea.sflag [#allocation4], %s348
        %s350 = sand.u32 %s227, 1
        %s351 = smul.addr %s350, 8
        %s352 = scalar_lea.vmem [#allocation7], %s351
        %p353 = scmp.lt.s32.totalorder %s25, 1
        %s354 = scalar_select %p353, %s25, 1
        %s355 = smul.addr %s354, 4
        %s356 = scalar_lea.vmem %s0, %s355
        %v357 = vld [vmem:[%s356] sm:$0xf]
        %v358 = vld [vmem:[%s2] sm:$0xff]
        %v359 = vld [vmem:[%s3] sm:$0xff]
        %361 = vset.pattern.permute.xlu0 0
        %362 = vperm.xlu0 %361, %v359
        %v363 = vpop.permute.xlu0 %362
        %vm365 = vcmask 31744
        %v367 = vsel %vm365, %v358, 0
        %vm369 = vcmask 1043456
        %v371 = vsel %vm369, %v357, 0
        %373 = vmatprep.subr.mxu0 0.0
        %374 = vmatpush1.msra.mxu0 0.0
        %375 = vmatprep.subr.mxu0 0.0
        %376 = vmatpush1.msra.mxu0 0.0
        %377 = vmatprep.subr.mxu0 0.0
        %378 = vmatpush1.msra.mxu0 0.0
        %379 = vmatprep.subr.mxu0 0.0
        %380 = vmatpush1.msra.mxu0 0.0
        %381 = vmatprep.subr.mxu0 0.0
        %382 = vmatpush1.msra.mxu0 0.0
        %383 = vmatprep.subr.mxu0 0.0
        %384 = vmatpush1.msra.mxu0 0.0
        %385 = vmatprep.subr.mxu0 0.0
        %386 = vmatpush1.msra.mxu0 0.0
        %387 = vmatprep.subr.mxu0 0.0
        %388 = vmatpush1.msra.mxu0 0.0
        %389 = vmatprep.subr.mxu0 0.0
        %390 = vmatpush1.msra.mxu0 0.0
        %391 = vmatprep.subr.mxu0 0.0
        %392 = vmatpush1.msra.mxu0 0.0
        %393 = vmatprep.subr.mxu0 0.0
        %394 = vmatpush1.msra.mxu0 0.0
        %395 = vmatprep.subr.mxu0 0.0
        %396 = vmatpush1.msra.mxu0 0.0
        %397 = vmatprep.subr.mxu0 0.0
        %398 = vmatpush1.msra.mxu0 0.0
        %399 = vmatprep.subr.mxu0 0.0
        %400 = vmatpush1.msra.mxu0 0.0
        %401 = vmatprep.subr.mxu0 0.0
        %402 = vmatpush1.msra.mxu0 0.0
        %403 = vmatprep.subr.mxu0 0.0
        %404 = vmatpush1.msra.mxu0 %v371
        %405 = vmatprep.subr.mxu0 0.0
        %406 = vmatpush2.msra.mxu0 0.0
        %407 = vmatprep.subr.mxu0 0.0
        %408 = vmatpush2.msra.mxu0 0.0
        %409 = vmatprep.subr.mxu0 0.0
        %410 = vmatpush2.msra.mxu0 0.0
        %411 = vmatprep.subr.mxu0 0.0
        %412 = vmatpush2.msra.mxu0 0.0
        %413 = vmatprep.subr.mxu0 0.0
        %414 = vmatpush2.msra.mxu0 0.0
        %415 = vmatprep.subr.mxu0 0.0
        %416 = vmatpush2.msra.mxu0 0.0
        %417 = vmatprep.subr.mxu0 0.0
        %418 = vmatpush2.msra.mxu0 0.0
        %419 = vmatprep.subr.mxu0 0.0
        %420 = vmatpush2.msra.mxu0 0.0
        %421 = vmatprep.subr.mxu0 0.0
        %422 = vmatpush2.msra.mxu0 0.0
        %423 = vmatprep.subr.mxu0 0.0
        %424 = vmatpush2.msra.mxu0 0.0
        %425 = vmatprep.subr.mxu0 0.0
        %426 = vmatpush2.msra.mxu0 0.0
        %427 = vmatprep.subr.mxu0 0.0
        %428 = vmatpush2.msra.mxu0 0.0
        %429 = vmatprep.subr.mxu0 0.0
        %430 = vmatpush2.msra.mxu0 0.0
        %431 = vmatprep.subr.mxu0 0.0
        %432 = vmatpush2.msra.mxu0 0.0
        %433 = vmatprep.subr.mxu0 0.0
        %434 = vmatpush2.msra.mxu0 0.0
        %435 = vmatprep.subr.mxu0 0.0
        %436 = vmatpush2.msra.mxu0 0.0
        %437 = vmatprep.mubr.f32.mxu0 0.0
        %438 = vmatmul.mubr.f32.gmra.mxu0 %v367
        %v439 = vpop.f32.mrf.mxu0
        %v440 = vadd.f32 %v363, %v439
        %v441 = vpop.f32.mrf.mxu0
        %442 = vdwg.mxu0
        %v443 = vld [vmem:[#allocation2] sm:$0xff]
        %v444 = vld [vmem:[#allocation2 + $0x8] sm:$0xff]
        %v445 = vld [vmem:[#allocation2 + $0x10] sm:$0xff]
        %v446 = vld [vmem:[#allocation2 + $0x18] sm:$0xff]
        %v447 = vld [vmem:[#allocation2 + $0x20] sm:$0xff]
        %v448 = vld [vmem:[#allocation2 + $0x28] sm:$0xff]
        %v449 = vld [vmem:[#allocation2 + $0x30] sm:$0xff]
        %v450 = vld [vmem:[#allocation2 + $0x38] sm:$0xff]
        %v451 = vld [vmem:[#allocation2 + $0x40] sm:$0xff]
        %v452 = vld [vmem:[#allocation2 + $0x48] sm:$0xff]
        %v453 = vld [vmem:[#allocation2 + $0x50] sm:$0xff]
        %v454 = vld [vmem:[#allocation2 + $0x58] sm:$0xff]
        %v455 = vld [vmem:[#allocation2 + $0x60] sm:$0xff]
        %v456 = vld [vmem:[#allocation2 + $0x68] sm:$0xff]
        %v457 = vld [vmem:[#allocation2 + $0x70] sm:$0xff]
        %v458 = vld [vmem:[#allocation2 + $0x78] sm:$0xff]
        %v459 = vld [vmem:[%s4] sm:$0xff]
        %461 = vset.pattern.permute.xlu0 0
        %462 = vperm.xlu0 %461, %v459
        %v463 = vpop.permute.xlu0 %462
        %465 = vmatprep.subr.mxu0 0.0
        %466 = vmatpush1.msra.mxu0 %v458
        %467 = vmatprep.subr.mxu0 0.0
        %468 = vmatpush1.msra.mxu0 %v457
        %469 = vmatprep.subr.mxu0 0.0
        %470 = vmatpush1.msra.mxu0 %v456
        %471 = vmatprep.subr.mxu0 0.0
        %472 = vmatpush1.msra.mxu0 %v455
        %473 = vmatprep.subr.mxu0 0.0
        %474 = vmatpush1.msra.mxu0 %v454
        %475 = vmatprep.subr.mxu0 0.0
        %476 = vmatpush1.msra.mxu0 %v453
        %477 = vmatprep.subr.mxu0 0.0
        %478 = vmatpush1.msra.mxu0 %v452
        %479 = vmatprep.subr.mxu0 0.0
        %480 = vmatpush1.msra.mxu0 %v451
        %481 = vmatprep.subr.mxu0 0.0
        %482 = vmatpush1.msra.mxu0 %v450
        %483 = vmatprep.subr.mxu0 0.0
        %484 = vmatpush1.msra.mxu0 %v449
        %485 = vmatprep.subr.mxu0 0.0
        %486 = vmatpush1.msra.mxu0 %v448
        %487 = vmatprep.subr.mxu0 0.0
        %488 = vmatpush1.msra.mxu0 %v447
        %489 = vmatprep.subr.mxu0 0.0
        %490 = vmatpush1.msra.mxu0 %v446
        %491 = vmatprep.subr.mxu0 0.0
        %492 = vmatpush1.msra.mxu0 %v445
        %493 = vmatprep.subr.mxu0 0.0
        %494 = vmatpush1.msra.mxu0 %v444
        %495 = vmatprep.subr.mxu0 0.0
        %496 = vmatpush1.msra.mxu0 %v443
        %497 = vmatprep.subr.mxu0 0.0
        %498 = vmatpush2.msra.mxu0 0.0
        %499 = vmatprep.subr.mxu0 0.0
        %500 = vmatpush2.msra.mxu0 0.0
        %501 = vmatprep.subr.mxu0 0.0
        %502 = vmatpush2.msra.mxu0 0.0
        %503 = vmatprep.subr.mxu0 0.0
        %504 = vmatpush2.msra.mxu0 0.0
        %505 = vmatprep.subr.mxu0 0.0
        %506 = vmatpush2.msra.mxu0 0.0
        %507 = vmatprep.subr.mxu0 0.0
        %508 = vmatpush2.msra.mxu0 0.0
        %509 = vmatprep.subr.mxu0 0.0
        %510 = vmatpush2.msra.mxu0 0.0
        %511 = vmatprep.subr.mxu0 0.0
        %512 = vmatpush2.msra.mxu0 0.0
        %513 = vmatprep.subr.mxu0 0.0
        %514 = vmatpush2.msra.mxu0 0.0
        %515 = vmatprep.subr.mxu0 0.0
        %516 = vmatpush2.msra.mxu0 0.0
        %517 = vmatprep.subr.mxu0 0.0
        %518 = vmatpush2.msra.mxu0 0.0
        %519 = vmatprep.subr.mxu0 0.0
        %520 = vmatpush2.msra.mxu0 0.0
        %521 = vmatprep.subr.mxu0 0.0
        %522 = vmatpush2.msra.mxu0 0.0
        %523 = vmatprep.subr.mxu0 0.0
        %524 = vmatpush2.msra.mxu0 0.0
        %525 = vmatprep.subr.mxu0 0.0
        %526 = vmatpush2.msra.mxu0 0.0
        %527 = vmatprep.subr.mxu0 0.0
        %528 = vmatpush2.msra.mxu0 0.0
        %529 = vmatprep.mubr.f32.mxu0 0.0
        %530 = vmatmul.mubr.f32.gmra.mxu0 %v440
        %v531 = vpop.f32.mrf.mxu0
        %v532 = vadd.f32 %v463, %v531
        %v533 = vpop.f32.mrf.mxu0
        %534 = vdwg.mxu0
        %s535 = sld [smem:[#allocation6]]
        %vm536 = vcmp.gt.f32.partialorder %v532, 0.0
        %v537 = vstv %s535
        %v538 = vmul.f32 %v537, %v532
        %v539 = vsel %vm536, %v532, %v538
        %541 = vrot.lane.b32.xlu0 %v539, 16
        %v542 = vpop.permute.xlu0 %541
        %vm544 = vcmask 130048
        %v545 = vsel %vm544, 0.0, %v542
        %v546 = vsel %vm544, %v542, 0.0
        %v547 = vld [vmem:[%s6] sm:$0xff]
        %v548 = vld [vmem:[%s7] sm:$0xff]
        %550 = vset.pattern.permute.xlu0 0
        %551 = vperm.xlu0 %550, %v548
        %v552 = vpop.permute.xlu0 %551
        %v555 = vsel %vm365, %v547, 0
        %557 = vmatprep.subr.mxu0 0.0
        %558 = vmatpush1.msra.mxu0 0.0
        %559 = vmatprep.subr.mxu0 0.0
        %560 = vmatpush1.msra.mxu0 0.0
        %561 = vmatprep.subr.mxu0 0.0
        %562 = vmatpush1.msra.mxu0 0.0
        %563 = vmatprep.subr.mxu0 0.0
        %564 = vmatpush1.msra.mxu0 0.0
        %565 = vmatprep.subr.mxu0 0.0
        %566 = vmatpush1.msra.mxu0 0.0
        %567 = vmatprep.subr.mxu0 0.0
        %568 = vmatpush1.msra.mxu0 0.0
        %569 = vmatprep.subr.mxu0 0.0
        %570 = vmatpush1.msra.mxu0 0.0
        %571 = vmatprep.subr.mxu0 0.0
        %572 = vmatpush1.msra.mxu0 0.0
        %573 = vmatprep.subr.mxu0 0.0
        %574 = vmatpush1.msra.mxu0 0.0
        %575 = vmatprep.subr.mxu0 0.0
        %576 = vmatpush1.msra.mxu0 0.0
        %577 = vmatprep.subr.mxu0 0.0
        %578 = vmatpush1.msra.mxu0 0.0
        %579 = vmatprep.subr.mxu0 0.0
        %580 = vmatpush1.msra.mxu0 0.0
        %581 = vmatprep.subr.mxu0 0.0
        %582 = vmatpush1.msra.mxu0 0.0
        %583 = vmatprep.subr.mxu0 0.0
        %584 = vmatpush1.msra.mxu0 0.0
        %585 = vmatprep.subr.mxu0 0.0
        %586 = vmatpush1.msra.mxu0 0.0
        %587 = vmatprep.subr.mxu0 0.0
        %588 = vmatpush1.msra.mxu0 %v371
        %589 = vmatprep.subr.mxu0 0.0
        %590 = vmatpush2.msra.mxu0 0.0
        %591 = vmatprep.subr.mxu0 0.0
        %592 = vmatpush2.msra.mxu0 0.0
        %593 = vmatprep.subr.mxu0 0.0
        %594 = vmatpush2.msra.mxu0 0.0
        %595 = vmatprep.subr.mxu0 0.0
        %596 = vmatpush2.msra.mxu0 0.0
        %597 = vmatprep.subr.mxu0 0.0
        %598 = vmatpush2.msra.mxu0 0.0
        %599 = vmatprep.subr.mxu0 0.0
        %600 = vmatpush2.msra.mxu0 0.0
        %601 = vmatprep.subr.mxu0 0.0
        %602 = vmatpush2.msra.mxu0 0.0
        %603 = vmatprep.subr.mxu0 0.0
        %604 = vmatpush2.msra.mxu0 0.0
        %605 = vmatprep.subr.mxu0 0.0
        %606 = vmatpush2.msra.mxu0 0.0
        %607 = vmatprep.subr.mxu0 0.0
        %608 = vmatpush2.msra.mxu0 0.0
        %609 = vmatprep.subr.mxu0 0.0
        %610 = vmatpush2.msra.mxu0 0.0
        %611 = vmatprep.subr.mxu0 0.0
        %612 = vmatpush2.msra.mxu0 0.0
        %613 = vmatprep.subr.mxu0 0.0
        %614 = vmatpush2.msra.mxu0 0.0
        %615 = vmatprep.subr.mxu0 0.0
        %616 = vmatpush2.msra.mxu0 0.0
        %617 = vmatprep.subr.mxu0 0.0
        %618 = vmatpush2.msra.mxu0 0.0
        %619 = vmatprep.subr.mxu0 0.0
        %620 = vmatpush2.msra.mxu0 0.0
        %621 = vmatprep.mubr.f32.mxu0 0.0
        %622 = vmatmul.mubr.f32.gmra.mxu0 %v555
        %v623 = vpop.f32.mrf.mxu0
        %v624 = vadd.f32 %v552, %v623
        %v625 = vpop.f32.mrf.mxu0
        %626 = vdwg.mxu0
        %v627 = vld [vmem:[%s5] sm:$0xff]
        %vm628 = vcmask 64512
        %v630 = vsel %vm628, %v627, 0
        %632 = vmatprep.subr.mxu0 0.0
        %633 = vmatpush1.msra.mxu0 0.0
        %634 = vmatprep.subr.mxu0 0.0
        %635 = vmatpush1.msra.mxu0 0.0
        %636 = vmatprep.subr.mxu0 0.0
        %637 = vmatpush1.msra.mxu0 0.0
        %638 = vmatprep.subr.mxu0 0.0
        %639 = vmatpush1.msra.mxu0 0.0
        %640 = vmatprep.subr.mxu0 0.0
        %641 = vmatpush1.msra.mxu0 0.0
        %642 = vmatprep.subr.mxu0 0.0
        %643 = vmatpush1.msra.mxu0 0.0
        %644 = vmatprep.subr.mxu0 0.0
        %645 = vmatpush1.msra.mxu0 0.0
        %646 = vmatprep.subr.mxu0 0.0
        %647 = vmatpush1.msra.mxu0 0.0
        %648 = vmatprep.subr.mxu0 0.0
        %649 = vmatpush1.msra.mxu0 0.0
        %650 = vmatprep.subr.mxu0 0.0
        %651 = vmatpush1.msra.mxu0 0.0
        %652 = vmatprep.subr.mxu0 0.0
        %653 = vmatpush1.msra.mxu0 0.0
        %654 = vmatprep.subr.mxu0 0.0
        %655 = vmatpush1.msra.mxu0 0.0
        %656 = vmatprep.subr.mxu0 0.0
        %657 = vmatpush1.msra.mxu0 0.0
        %658 = vmatprep.subr.mxu0 0.0
        %659 = vmatpush1.msra.mxu0 0.0
        %660 = vmatprep.subr.mxu0 0.0
        %661 = vmatpush1.msra.mxu0 0.0
        %662 = vmatprep.subr.mxu0 0.0
        %663 = vmatpush1.msra.mxu0 %v545
        %664 = vmatprep.subr.mxu0 0.0
        %665 = vmatpush2.msra.mxu0 0.0
        %666 = vmatprep.subr.mxu0 0.0
        %667 = vmatpush2.msra.mxu0 0.0
        %668 = vmatprep.subr.mxu0 0.0
        %669 = vmatpush2.msra.mxu0 0.0
        %670 = vmatprep.subr.mxu0 0.0
        %671 = vmatpush2.msra.mxu0 0.0
        %672 = vmatprep.subr.mxu0 0.0
        %673 = vmatpush2.msra.mxu0 0.0
        %674 = vmatprep.subr.mxu0 0.0
        %675 = vmatpush2.msra.mxu0 0.0
        %676 = vmatprep.subr.mxu0 0.0
        %677 = vmatpush2.msra.mxu0 0.0
        %678 = vmatprep.subr.mxu0 0.0
        %679 = vmatpush2.msra.mxu0 0.0
        %680 = vmatprep.subr.mxu0 0.0
        %681 = vmatpush2.msra.mxu0 0.0
        %682 = vmatprep.subr.mxu0 0.0
        %683 = vmatpush2.msra.mxu0 0.0
        %684 = vmatprep.subr.mxu0 0.0
        %685 = vmatpush2.msra.mxu0 0.0
        %686 = vmatprep.subr.mxu0 0.0
        %687 = vmatpush2.msra.mxu0 0.0
        %688 = vmatprep.subr.mxu0 0.0
        %689 = vmatpush2.msra.mxu0 0.0
        %690 = vmatprep.subr.mxu0 0.0
        %691 = vmatpush2.msra.mxu0 0.0
        %692 = vmatprep.subr.mxu0 0.0
        %693 = vmatpush2.msra.mxu0 0.0
        %694 = vmatprep.subr.mxu0 0.0
        %695 = vmatpush2.msra.mxu0 0.0
        %696 = vmatprep.mubr.f32.mxu0 0.0
        %697 = vmatmul.mubr.f32.gmra.mxu0 %v630
        %v698 = vpop.f32.mrf.mxu0
        %v699 = vadd.f32 0.0, %v698
        %v700 = vpop.f32.mrf.mxu0
        %701 = vdwg.mxu0
        %v702 = vadd.f32 %v624, %v699
        %s703 = scalar_lea.vmem %s5, 8
        %v704 = vld [vmem:[%s703] sm:$0xff]
        %v706 = vsel %vm628, %v704, 0
        %708 = vmatprep.subr.mxu0 0.0
        %709 = vmatpush1.msra.mxu0 0.0
        %710 = vmatprep.subr.mxu0 0.0
        %711 = vmatpush1.msra.mxu0 0.0
        %712 = vmatprep.subr.mxu0 0.0
        %713 = vmatpush1.msra.mxu0 0.0
        %714 = vmatprep.subr.mxu0 0.0
        %715 = vmatpush1.msra.mxu0 0.0
        %716 = vmatprep.subr.mxu0 0.0
        %717 = vmatpush1.msra.mxu0 0.0
        %718 = vmatprep.subr.mxu0 0.0
        %719 = vmatpush1.msra.mxu0 0.0
        %720 = vmatprep.subr.mxu0 0.0
        %721 = vmatpush1.msra.mxu0 0.0
        %722 = vmatprep.subr.mxu0 0.0
        %723 = vmatpush1.msra.mxu0 0.0
        %724 = vmatprep.subr.mxu0 0.0
        %725 = vmatpush1.msra.mxu0 0.0
        %726 = vmatprep.subr.mxu0 0.0
        %727 = vmatpush1.msra.mxu0 0.0
        %728 = vmatprep.subr.mxu0 0.0
        %729 = vmatpush1.msra.mxu0 0.0
        %730 = vmatprep.subr.mxu0 0.0
        %731 = vmatpush1.msra.mxu0 0.0
        %732 = vmatprep.subr.mxu0 0.0
        %733 = vmatpush1.msra.mxu0 0.0
        %734 = vmatprep.subr.mxu0 0.0
        %735 = vmatpush1.msra.mxu0 0.0
        %736 = vmatprep.subr.mxu0 0.0
        %737 = vmatpush1.msra.mxu0 0.0
        %738 = vmatprep.subr.mxu0 0.0
        %739 = vmatpush1.msra.mxu0 %v539
        %740 = vmatprep.subr.mxu0 0.0
        %741 = vmatpush2.msra.mxu0 0.0
        %742 = vmatprep.subr.mxu0 0.0
        %743 = vmatpush2.msra.mxu0 0.0
        %744 = vmatprep.subr.mxu0 0.0
        %745 = vmatpush2.msra.mxu0 0.0
        %746 = vmatprep.subr.mxu0 0.0
        %747 = vmatpush2.msra.mxu0 0.0
        %748 = vmatprep.subr.mxu0 0.0
        %749 = vmatpush2.msra.mxu0 0.0
        %750 = vmatprep.subr.mxu0 0.0
        %751 = vmatpush2.msra.mxu0 0.0
        %752 = vmatprep.subr.mxu0 0.0
        %753 = vmatpush2.msra.mxu0 0.0
        %754 = vmatprep.subr.mxu0 0.0
        %755 = vmatpush2.msra.mxu0 0.0
        %756 = vmatprep.subr.mxu0 0.0
        %757 = vmatpush2.msra.mxu0 0.0
        %758 = vmatprep.subr.mxu0 0.0
        %759 = vmatpush2.msra.mxu0 0.0
        %760 = vmatprep.subr.mxu0 0.0
        %761 = vmatpush2.msra.mxu0 0.0
        %762 = vmatprep.subr.mxu0 0.0
        %763 = vmatpush2.msra.mxu0 0.0
        %764 = vmatprep.subr.mxu0 0.0
        %765 = vmatpush2.msra.mxu0 0.0
        %766 = vmatprep.subr.mxu0 0.0
        %767 = vmatpush2.msra.mxu0 0.0
        %768 = vmatprep.subr.mxu0 0.0
        %769 = vmatpush2.msra.mxu0 0.0
        %770 = vmatprep.subr.mxu0 0.0
        %771 = vmatpush2.msra.mxu0 0.0
        %772 = vmatprep.mubr.f32.mxu0 0.0
        %773 = vmatmul.mubr.f32.gmra.mxu0 %v706
        %v774 = vpop.f32.mrf.mxu0
        %v775 = vadd.f32 0.0, %v774
        %v776 = vpop.f32.mrf.mxu0
        %777 = vdwg.mxu0
        %v778 = vadd.f32 %v702, %v775
        %s779 = scalar_lea.vmem %s5, 16
        %v780 = vld [vmem:[%s779] sm:$0xff]
        %783 = vrot.lane.b32.xlu0 %v545, 96
        %v784 = vpop.permute.xlu0 %783
        %785 = vrot.lane.b32.xlu0 %v546, 96
        %v786 = vpop.permute.xlu0 %785
        %vm787 = vcmask 785408
        %v788 = vsel %vm787, %v784, %v786
        %v791 = vsel %vm628, %v780, 0
        %793 = vmatprep.subr.mxu0 0.0
        %794 = vmatpush1.msra.mxu0 0.0
        %795 = vmatprep.subr.mxu0 0.0
        %796 = vmatpush1.msra.mxu0 0.0
        %797 = vmatprep.subr.mxu0 0.0
        %798 = vmatpush1.msra.mxu0 0.0
        %799 = vmatprep.subr.mxu0 0.0
        %800 = vmatpush1.msra.mxu0 0.0
        %801 = vmatprep.subr.mxu0 0.0
        %802 = vmatpush1.msra.mxu0 0.0
        %803 = vmatprep.subr.mxu0 0.0
        %804 = vmatpush1.msra.mxu0 0.0
        %805 = vmatprep.subr.mxu0 0.0
        %806 = vmatpush1.msra.mxu0 0.0
        %807 = vmatprep.subr.mxu0 0.0
        %808 = vmatpush1.msra.mxu0 0.0
        %809 = vmatprep.subr.mxu0 0.0
        %810 = vmatpush1.msra.mxu0 0.0
        %811 = vmatprep.subr.mxu0 0.0
        %812 = vmatpush1.msra.mxu0 0.0
        %813 = vmatprep.subr.mxu0 0.0
        %814 = vmatpush1.msra.mxu0 0.0
        %815 = vmatprep.subr.mxu0 0.0
        %816 = vmatpush1.msra.mxu0 0.0
        %817 = vmatprep.subr.mxu0 0.0
        %818 = vmatpush1.msra.mxu0 0.0
        %819 = vmatprep.subr.mxu0 0.0
        %820 = vmatpush1.msra.mxu0 0.0
        %821 = vmatprep.subr.mxu0 0.0
        %822 = vmatpush1.msra.mxu0 0.0
        %823 = vmatprep.subr.mxu0 0.0
        %824 = vmatpush1.msra.mxu0 %v788
        %825 = vmatprep.subr.mxu0 0.0
        %826 = vmatpush2.msra.mxu0 0.0
        %827 = vmatprep.subr.mxu0 0.0
        %828 = vmatpush2.msra.mxu0 0.0
        %829 = vmatprep.subr.mxu0 0.0
        %830 = vmatpush2.msra.mxu0 0.0
        %831 = vmatprep.subr.mxu0 0.0
        %832 = vmatpush2.msra.mxu0 0.0
        %833 = vmatprep.subr.mxu0 0.0
        %834 = vmatpush2.msra.mxu0 0.0
        %835 = vmatprep.subr.mxu0 0.0
        %836 = vmatpush2.msra.mxu0 0.0
        %837 = vmatprep.subr.mxu0 0.0
        %838 = vmatpush2.msra.mxu0 0.0
        %839 = vmatprep.subr.mxu0 0.0
        %840 = vmatpush2.msra.mxu0 0.0
        %841 = vmatprep.subr.mxu0 0.0
        %842 = vmatpush2.msra.mxu0 0.0
        %843 = vmatprep.subr.mxu0 0.0
        %844 = vmatpush2.msra.mxu0 0.0
        %845 = vmatprep.subr.mxu0 0.0
        %846 = vmatpush2.msra.mxu0 0.0
        %847 = vmatprep.subr.mxu0 0.0
        %848 = vmatpush2.msra.mxu0 0.0
        %849 = vmatprep.subr.mxu0 0.0
        %850 = vmatpush2.msra.mxu0 0.0
        %851 = vmatprep.subr.mxu0 0.0
        %852 = vmatpush2.msra.mxu0 0.0
        %853 = vmatprep.subr.mxu0 0.0
        %854 = vmatpush2.msra.mxu0 0.0
        %855 = vmatprep.subr.mxu0 0.0
        %856 = vmatpush2.msra.mxu0 0.0
        %857 = vmatprep.mubr.f32.mxu0 0.0
        %858 = vmatmul.mubr.f32.gmra.mxu0 %v791
        %v859 = vpop.f32.mrf.mxu0
        %v860 = vadd.f32 0.0, %v859
        %v861 = vpop.f32.mrf.mxu0
        %862 = vdwg.mxu0
        %v863 = vadd.f32 %v778, %v860
        %s864 = sld [smem:[#allocation6 + $0x1]]
        %vm865 = vcmp.gt.f32.partialorder %v863, 0.0
        %v866 = vstv %s864
        %v867 = vmul.f32 %v866, %v863
        %v868 = vsel %vm865, %v863, %v867
        %869 = vst [vmem:[%s352] sm:$0xff] %v868
        %s870 = sand.u32 %s227, 1
        %s871 = scalar_lea.sflag [#allocation4], %s870
        %s872 = sand.u32 %s227, 1
        %s873 = smul.addr %s872, 8
        %s874 = scalar_lea.vmem [#allocation7], %s873
        // Predicated region
        $region65: #{tpu_custom_call.1} parent=55 // pred_check
          %p875 = pneg %p237
        $region66: #{tpu_custom_call.1} parent=55 // pred_check_branch
          %877 = sbr.rel (%p875) target = $region68
        $region67: #{tpu_custom_call.1} parent=55 // pred_region
          %s879 = ssub.s32 128, 128
          %880 = vsyncadd %s871, %s879
          %s881 = smul.addr %s25, 128
          %s882 = scalar_lea.hbm %s9, %s881
          %s884 = sshll.u32 %s874, 4
          %s885 = int_to_ptr.vmem [resolvable:$true] %s884
          %887 = dma.vmem_to_hbm [thread:$0]  %s885, 128, %s882, %s871
        $region68: #{tpu_custom_call.1} parent=55 // pred_fallthru
          _
      $region56: #{tpu_custom_call.1} parent=5 // pred_fallthru
        _
      %p888 = scmp.le.s32.totalorder 2, %s20
      // Predicated region
      $region69: #{tpu_custom_call.1} parent=5 // pred_check
        %p889 = pneg %p888
      $region70: #{tpu_custom_call.1} parent=5 // pred_check_branch
        %891 = sbr.rel (%p889) target = $region72
      $region71: #{tpu_custom_call.1} parent=5 // pred_region
        %s892 = ssub.s32 %s20, 2
        // Predicated region
        $region73: #{tpu_custom_call.1} parent=71 // pred_check
          %p893 = pneg %p243
        $region74: #{tpu_custom_call.1} parent=71 // pred_check_branch
          %895 = sbr.rel (%p893) target = $region76
        $region75: #{tpu_custom_call.1} parent=71 // pred_region
          %s896 = sand.u32 %s228, 1
          %s897 = scalar_lea.sflag [#allocation4], %s896
          %s898 = sand.u32 %s228, 1
          %s899 = smul.addr %s898, 8
          %s900 = scalar_lea.vmem [#allocation7], %s899
          %901 = dma.done %s897, 128
        $region76: #{tpu_custom_call.1} parent=71 // pred_fallthru
          _
      $region72: #{tpu_custom_call.1} parent=5 // pred_fallthru
        _
    $region6: #{tpu_custom_call.1} parent=1 // loop_footer
      %s24 = sadd.s32 1, %s20
    $region7: #{tpu_custom_call.1} parent=1 // loop_footer_branch
      %19 = sbr.rel target = $region3
    $region8: #{tpu_custom_call.1} parent=1 // loop_exit
      _
    %902 = vsyncpa [#allocation3], 1
    %s903 = scalar_lea.sflag [#allocation3], 1
    %904 = vsyncpa %s903, 1
    %905 = vsyncpa [#allocation4], 1
    %s906 = scalar_lea.sflag [#allocation4], 1
    %907 = vsyncpa %s906, 1
    %908 = vsyncpa [#allocation5], 1
    %s909 = scalar_lea.sflag [#allocation5], 1
    %910 = vsyncpa %s909, 1

</llo_original>
